<compile_context>
chip_gen: v6e
topology: v6e:2x2x1
jax: 0.10.0
libtpu: 0.0.40
codegen_flags: <defaults>
</compile_context>

<pallas_src>
import functools
from typing import NamedTuple, Optional

import jax
import jax.numpy as jnp
from jax.experimental import pallas as pl
from jax.experimental.pallas import tpu as pltpu


def _round_up(a, b):
    return (a + b - 1) // b * b


def _vmem_budget_and_limit():
    """Generation-aware VMEM planning budget and scoped-VMEM limit."""
    try:
        cap = int(pltpu.get_tpu_info().vmem_capacity_bytes)
    except Exception:
        cap = 64 * 1024 * 1024  # conservative (v7x per-core VMEM)
    budget = int(cap * 0.75)
    limit = max(budget, 32 * 1024 * 1024)
    return budget, limit


def _pick_tk(d_in_p, d_h_p, w_bytes, budget):
    """Full K (resident weight) if it fits ~1/3 of budget, else a K-split tile."""
    w_total = d_in_p * 2 * d_h_p * w_bytes  # single-buffered resident weight
    if w_total <= budget // 3:
        return d_in_p
    n_blocks = d_in_p // 128
    tk = 128
    for kt in range(1, n_blocks + 1):
        if n_blocks % kt == 0 and 2 * (d_in_p // kt) * 2 * d_h_p * w_bytes <= budget // 3:
            tk = d_in_p // kt
            break
    return tk


def _plan(m, d_in_p, d_h_p, act_bytes, w_bytes, tm_max, budget):
    """Pick (tm, tk) under the VMEM budget."""
    tk = _pick_tk(d_in_p, d_h_p, w_bytes, budget)
    single_k = tk == d_in_p
    w_resident = (1 if single_k else 2) * tk * 2 * d_h_p * w_bytes

    def footprint(tm):
        x_stream = 2 * tm * tk * act_bytes                 # x tiles, double-buffered
        res_out = 4 * tm * d_h_p * act_bytes               # residual + out, double-buffered
        acc = 0 if single_k else tm * 2 * d_h_p * 4        # f32 accumulator scratch
        live = 3 * tm * 2 * d_h_p * 4                      # live f32 intermediates (measured ~3x)
        return x_stream + res_out + w_resident + acc + live + 5 * d_h_p * 4

    cap = min(tm_max, _round_up(m, 8))
    if m > 8:
        # Keep >= 2 row blocks so v7x megacore (2 TCs) can shard the parallel axis.
        cap = min(cap, _round_up(-(-m // 2), 8))
    tm = 8
    for cand in (8, 16, 32, 64, 128, 256, 512, 1024, 2048):
        if cand <= cap and footprint(cand) <= budget:
            tm = cand
    return tm, tk


# ----------------------------------------------------------------------------
# Kernels
# ----------------------------------------------------------------------------

def _epilogue(lin, res, p_ref, o_ref, *, d_h, eps):
    """GLU gate + residual add + LayerNorm on an f32 (tm, 2*d_h_pad) matmul result."""
    d_h_pad = o_ref.shape[-1]
    lin4 = lin[:, :d_h_pad] + p_ref[0:1, :]
    lin5 = lin[:, d_h_pad:] + p_ref[1:2, :]
    gated = jax.nn.sigmoid(lin4) * lin5

    y = gated + res.astype(jnp.float32)

    # Padded hidden lanes of y are exactly zero (zero-padded W columns, biases
    # and residual), so the plain lane-sum / true d_h is the correct mean.
    inv_dh = 1.0 / d_h
    mean = jnp.sum(y, axis=-1, keepdims=True) * inv_dh
    centered = y - mean
    if d_h != d_h_pad:
        masked = centered * p_ref[4:5, :]   # precomputed f32 lane mask row
    else:
        masked = centered
    var = jnp.sum(masked * masked, axis=-1, keepdims=True) * inv_dh

    normed = centered * jax.lax.rsqrt(var + eps)
    o_ref[...] = (normed * p_ref[2:3, :] + p_ref[3:4, :]).astype(o_ref.dtype)


def _gan_kernel(x_ref, res_ref, w_ref, p_ref, o_ref, *, d_h, eps):
    x = x_ref[...]
    w = w_ref[...]
    if x.dtype != w.dtype:
        x = x.astype(w.dtype)
    lin = jnp.dot(x, w, preferred_element_type=jnp.float32)
    _epilogue(lin, res_ref[...], p_ref, o_ref, d_h=d_h, eps=eps)


def _gan_ksplit_kernel(x_ref, res_ref, w_ref, p_ref, o_ref, acc_ref, *, d_h, eps):
    k = pl.program_id(1)

    @pl.when(k == 0)
    def _():
        acc_ref[...] = jnp.zeros_like(acc_ref)

    x = x_ref[...]
    w = w_ref[...]
    if x.dtype != w.dtype:
        x = x.astype(w.dtype)
    acc_ref[...] += jnp.dot(x, w, preferred_element_type=jnp.float32)

    @pl.when(k == pl.num_programs(1) - 1)
    def _():
        _epilogue(acc_ref[...], res_ref[...], p_ref, o_ref, d_h=d_h, eps=eps)


# ----------------------------------------------------------------------------
# Parameter preparation (hoisted out of the per-call path)
# ----------------------------------------------------------------------------

class GateAddNormParams(NamedTuple):
    w_fused: jax.Array   # (d_in_p, 2*d_h_p)  [W4 | W5], zero-padded, lane-dense
    packed: jax.Array    # (5, d_h_p) f32     [b4, b5, gamma, beta, lane_mask]
    d_in: int
    d_h: int


def prepare_gate_add_norm_params(w4, b4, w5, b5, gamma, beta,
                                 *, weight_dtype: Optional[jnp.dtype] = None):
    """Fuse + pad parameters once; reuse the result across forward calls.

    weight_dtype: optional opt-in downcast (e.g. jnp.bfloat16) for faster MXU
    matmuls; default keeps the weights' own dtype (numerics match reference).
    """
    d_in, d_h = w4.shape
    d_in_p = _round_up(d_in, 128)
    d_h_p = _round_up(d_h, 128)

    wdt = weight_dtype if weight_dtype is not None else w4.dtype
    w4p = jnp.pad(w4, ((0, d_in_p - d_in), (0, d_h_p - d_h)))
    w5p = jnp.pad(w5, ((0, d_in_p - d_in), (0, d_h_p - d_h)))
    w_fused = jnp.concatenate([w4p, w5p], axis=1).astype(wdt)

    def _padv(v):
        return jnp.pad(v.astype(jnp.float32), (0, d_h_p - d_h))

    lane_mask = (jnp.arange(d_h_p) < d_h).astype(jnp.float32)
    packed = jnp.stack([_padv(b4), _padv(b5), _padv(gamma), _padv(beta), lane_mask], axis=0)
    return GateAddNormParams(w_fused, packed, int(d_in), int(d_h))


# ----------------------------------------------------------------------------
# Forward wrapper
# ----------------------------------------------------------------------------

def gate_add_norm(x, residual, params: GateAddNormParams, *, eps=1e-5, tm_max=1024):
    """x: (..., input_size); residual: (..., hidden_size). Returns (..., hidden_size)."""
    d_in, d_h = params.d_in, params.d_h
    d_in_p, two_d_h_p = params.w_fused.shape
    d_h_p = two_d_h_p // 2

    orig_lead = x.shape[:-1]
    x2 = x.reshape(-1, d_in)
    r2 = residual.reshape(-1, d_h)
    m = x2.shape[0]

    # Lane-pad features to 128 multiples (needed for the lane-dense layout and
    # the LayerNorm padding math).  No row padding — the grid uses cdiv and
    # Pallas masks the ragged last row block.
    if d_in_p != d_in:
        x2 = jnp.pad(x2, ((0, 0), (0, d_in_p - d_in)))
    if d_h_p != d_h:
        r2 = jnp.pad(r2, ((0, 0), (0, d_h_p - d_h)))

    act_bytes = jnp.dtype(x.dtype).itemsize
    w_bytes = jnp.dtype(params.w_fused.dtype).itemsize
    budget, limit = _vmem_budget_and_limit()
    tm, tk = _plan(m, d_in_p, d_h_p, act_bytes, w_bytes, tm_max, budget)

    grid_m = pl.cdiv(m, tm)
    kt = d_in_p // tk

    def build(single_buffer_residents):
        resident_kw = (
            dict(pipeline_mode=pl.Buffered(1)) if single_buffer_residents else {}
        )
        if kt == 1:
            kernel = functools.partial(_gan_kernel, d_h=d_h, eps=float(eps))
            grid = (grid_m,)
            in_specs = [
                pl.BlockSpec((tm, d_in_p), lambda i: (i, 0)),                     # x row tile
                pl.BlockSpec((tm, d_h_p), lambda i: (i, 0)),                      # residual tile
                pl.BlockSpec((d_in_p, 2 * d_h_p), lambda i: (0, 0), **resident_kw),  # fused [W4|W5]
                pl.BlockSpec((5, d_h_p), lambda i: (0, 0), **resident_kw),        # b4/b5/gamma/beta/mask
            ]
            out_specs = pl.BlockSpec((tm, d_h_p), lambda i: (i, 0))
            scratch = []
            dims = ("parallel",)
        else:
            kernel = functools.partial(_gan_ksplit_kernel, d_h=d_h, eps=float(eps))
            grid = (grid_m, kt)
            in_specs = [
                pl.BlockSpec((tm, tk), lambda i, k: (i, k)),
                pl.BlockSpec((tm, d_h_p), lambda i, k: (i, 0)),
                pl.BlockSpec((tk, 2 * d_h_p), lambda i, k: (k, 0)),
                pl.BlockSpec((5, d_h_p), lambda i, k: (0, 0), **resident_kw),
            ]
            out_specs = pl.BlockSpec((tm, d_h_p), lambda i, k: (i, 0))
            scratch = [pltpu.VMEM((tm, 2 * d_h_p), jnp.float32)]
            dims = ("parallel", "arbitrary")

        return pl.pallas_call(
            kernel,
            out_shape=jax.ShapeDtypeStruct((m, d_h_p), x.dtype),
            grid_spec=pltpu.PrefetchScalarGridSpec(
                num_scalar_prefetch=0,
                grid=grid,
                in_specs=in_specs,
                out_specs=out_specs,
                scratch_shapes=scratch,
            ),
            compiler_params=pltpu.CompilerParams(
                dimension_semantics=dims,
                vmem_limit_bytes=limit,
            ),
        )

    try:
        out = build(True)(x2, r2, params.w_fused, params.packed)
    except Exception:
        # Fallback if this JAX version rejects pipeline_mode=pl.Buffered(1)
        # on pallas_call BlockSpecs: use default double-buffering.
        out = build(False)(x2, r2, params.w_fused, params.packed)

    if d_h_p != d_h:
        out = out[:, :d_h]
    return out.reshape(*orig_lead, d_h)


def gate_add_norm_raw(x, residual, w4, b4, w5, b5, gamma, beta,
                      *, eps=1e-5, tm_max=1024, weight_dtype=None):
    """Convenience path that fuses parameters on the fly (prefer preparing once)."""
    prepared = prepare_gate_add_norm_params(w4, b4, w5, b5, gamma, beta,
                                            weight_dtype=weight_dtype)
    return gate_add_norm(x, residual, prepared, eps=eps, tm_max=tm_max)


# ----------------------------------------------------------------------------
# Reference + demo
# ----------------------------------------------------------------------------

def _init_params(key, input_size, hidden_size):
    """Deterministic init mimicking nn.Linear / nn.LayerNorm defaults."""
    k4w, k4b, k5w, k5b = jax.random.split(key, 4)
    bound = 1.0 / jnp.sqrt(input_size)
    # Stored already transposed: (input_size, hidden_size).
    w4 = jax.random.uniform(k4w, (input_size, hidden_size), jnp.float32, -bound, bound)
    b4 = jax.random.uniform(k4b, (hidden_size,), jnp.float32, -bound, bound)
    w5 = jax.random.uniform(k5w, (input_size, hidden_size), jnp.float32, -bound, bound)
    b5 = jax.random.uniform(k5b, (hidden_size,), jnp.float32, -bound, bound)
    gamma = jnp.ones((hidden_size,), jnp.float32)
    beta = jnp.zeros((hidden_size,), jnp.float32)
    return w4, b4, w5, b5, gamma, beta


def _reference(x, residual, w4, b4, w5, b5, gamma, beta, eps=1e-5):
    lin4 = x @ w4 + b4
    lin5 = x @ w5 + b5
    gated = jax.nn.sigmoid(lin4) * lin5
    y = gated + residual
    mean = jnp.mean(y, axis=-1, keepdims=True)
    var = jnp.mean((y - mean) ** 2, axis=-1, keepdims=True)
    return (y - mean) / jnp.sqrt(var + eps) * gamma + beta


if __name__ == "__main__":
    batch, seq, input_size, hidden_size = 2, 8, 32, 32

    key = jax.random.PRNGKey(0)
    kx, kr, kp = jax.random.split(key, 3)
    x = jax.random.normal(kx, (batch, seq, input_size), jnp.float32)
    residual = jax.random.normal(kr, (batch, seq, hidden_size), jnp.float32)
    w4, b4, w5, b5, gamma, beta = _init_params(kp, input_size, hidden_size)

    # Hoisted one-time parameter fusion; reused across forward calls.
    prepared = prepare_gate_add_norm_params(w4, b4, w5, b5, gamma, beta)

    out = gate_add_norm(x, residual, prepared)
    out = jax.block_until_ready(out)

    ref = _reference(x, residual, w4, b4, w5, b5, gamma, beta)
    assert out.shape == (batch, seq, hidden_size)
    assert jnp.allclose(out, ref, atol=1e-5, rtol=1e-5), "mismatch vs reference"

    print("KERNEL_OK")
</pallas_src>

<mosaic_0001>
module attributes {stable_mosaic.version = 11 : i64} {
  func.func @_gan_kernel(%arg0: i32, %arg1: memref<8x128xf32, #tpu.memory_space<vmem>>, %arg2: memref<8x128xf32, #tpu.memory_space<vmem>>, %arg3: memref<128x256xf32, #tpu.memory_space<vmem>>, %arg4: memref<5x128xf32, #tpu.memory_space<vmem>>, %arg5: memref<8x128xf32, #tpu.memory_space<vmem>>) attributes {dimension_semantics = [#tpu.dimension_semantics<parallel>], iteration_bounds = array<i64: 2>, scalar_prefetch = 0 : i64, scratch_operands = 0 : i64, tpu.core_type = #tpu.core_type<tc>, window_params = [{transform_indices = @transform_0, window_bounds = array<i64: 8, 128>}, {transform_indices = @transform_1, window_bounds = array<i64: 8, 128>}, {pipeline_mode = #tpu.pipeline_mode<synchronous>, transform_indices = @transform_2, window_bounds = array<i64: 128, 256>}, {pipeline_mode = #tpu.pipeline_mode<synchronous>, transform_indices = @transform_3, window_bounds = array<i64: 5, 128>}, {transform_indices = @transform_4, window_bounds = array<i64: 8, 128>}]} {
    %c0 = arith.constant 0 : index
    %c0_0 = arith.constant 0 : index
    %0 = vector.load %arg1[%c0, %c0_0] : memref<8x128xf32, #tpu.memory_space<vmem>>, vector<8x128xf32>
    %c0_1 = arith.constant 0 : index
    %c0_2 = arith.constant 0 : index
    %1 = vector.load %arg3[%c0_1, %c0_2] : memref<128x256xf32, #tpu.memory_space<vmem>>, vector<128x256xf32>
    %cst = arith.constant dense<0.000000e+00> : vector<8x256xf32>
    %2 = tpu.matmul %0, %1, %cst {dimension_numbers = #tpu.dot_dimension_numbers<[1], [0], [0], [1], [0, 0, 1, 1], [], []>} : vector<8x128xf32>, vector<128x256xf32>, vector<8x256xf32> -> vector<8x256xf32>
    %c0_3 = arith.constant 0 : index
    %c0_4 = arith.constant 0 : index
    %3 = vector.load %arg2[%c0_3, %c0_4] : memref<8x128xf32, #tpu.memory_space<vmem>>, vector<8x128xf32>
    %4 = vector.extract_strided_slice %2 {offsets = [0, 0], sizes = [8, 128], strides = [1, 1]} : vector<8x256xf32> to vector<8x128xf32>
    %c0_5 = arith.constant 0 : index
    %c0_6 = arith.constant 0 : index
    %5 = vector.load %arg4[%c0_5, %c0_6] : memref<5x128xf32, #tpu.memory_space<vmem>>, vector<1x128xf32>
    %6 = vector.broadcast %5 : vector<1x128xf32> to vector<8x128xf32>
    %7 = arith.addf %4, %6 : vector<8x128xf32>
    %8 = vector.extract_strided_slice %2 {offsets = [0, 128], sizes = [8, 128], strides = [1, 1]} : vector<8x256xf32> to vector<8x128xf32>
    %c1 = arith.constant 1 : index
    %c0_7 = arith.constant 0 : index
    %9 = vector.load %arg4[%c1, %c0_7] : memref<5x128xf32, #tpu.memory_space<vmem>>, vector<1x128xf32>
    %10 = vector.broadcast %9 : vector<1x128xf32> to vector<8x128xf32>
    %11 = arith.addf %8, %10 : vector<8x128xf32>
    %12 = arith.negf %7 : vector<8x128xf32>
    %13 = math.exp %12 : vector<8x128xf32>
    %cst_8 = arith.constant 1.000000e+00 : f32
    %14 = vector.broadcast %cst_8 : f32 to vector<8x128xf32>
    %15 = arith.addf %14, %13 : vector<8x128xf32>
    %16 = arith.divf %14, %15 : vector<8x128xf32>
    %17 = arith.mulf %16, %11 : vector<8x128xf32>
    %18 = arith.addf %17, %3 : vector<8x128xf32>
    %cst_9 = arith.constant dense<0.000000e+00> : vector<8xf32>
    %19 = vector.multi_reduction <add>, %18, %cst_9 [1] : vector<8x128xf32> to vector<8xf32>
    %20 = vector.shape_cast %19 : vector<8xf32> to vector<8x1xf32>
    %cst_10 = arith.constant 3.125000e-02 : f32
    %21 = vector.broadcast %cst_10 : f32 to vector<8x1xf32>
    %22 = arith.mulf %20, %21 : vector<8x1xf32>
    %23 = vector.broadcast %22 : vector<8x1xf32> to vector<8x128xf32>
    %24 = arith.subf %18, %23 : vector<8x128xf32>
    %c4 = arith.constant 4 : index
    %c0_11 = arith.constant 0 : index
    %25 = vector.load %arg4[%c4, %c0_11] : memref<5x128xf32, #tpu.memory_space<vmem>>, vector<1x128xf32>
    %26 = vector.broadcast %25 : vector<1x128xf32> to vector<8x128xf32>
    %27 = arith.mulf %24, %26 : vector<8x128xf32>
    %28 = arith.mulf %27, %27 : vector<8x128xf32>
    %cst_12 = arith.constant dense<0.000000e+00> : vector<8xf32>
    %29 = vector.multi_reduction <add>, %28, %cst_12 [1] : vector<8x128xf32> to vector<8xf32>
    %30 = vector.shape_cast %29 : vector<8xf32> to vector<8x1xf32>
    %cst_13 = arith.constant 3.125000e-02 : f32
    %31 = vector.broadcast %cst_13 : f32 to vector<8x1xf32>
    %32 = arith.mulf %30, %31 : vector<8x1xf32>
    %cst_14 = arith.constant 9.99999974E-6 : f32
    %33 = vector.broadcast %cst_14 : f32 to vector<8x1xf32>
    %34 = arith.addf %32, %33 : vector<8x1xf32>
    %35 = math.rsqrt %34 : vector<8x1xf32>
    %36 = vector.broadcast %35 : vector<8x1xf32> to vector<8x128xf32>
    %37 = arith.mulf %24, %36 : vector<8x128xf32>
    %c2 = arith.constant 2 : index
    %c0_15 = arith.constant 0 : index
    %38 = vector.load %arg4[%c2, %c0_15] : memref<5x128xf32, #tpu.memory_space<vmem>>, vector<1x128xf32>
    %39 = vector.broadcast %38 : vector<1x128xf32> to vector<8x128xf32>
    %40 = arith.mulf %37, %39 : vector<8x128xf32>
    %c3 = arith.constant 3 : index
    %c0_16 = arith.constant 0 : index
    %41 = vector.load %arg4[%c3, %c0_16] : memref<5x128xf32, #tpu.memory_space<vmem>>, vector<1x128xf32>
    %42 = vector.broadcast %41 : vector<1x128xf32> to vector<8x128xf32>
    %43 = arith.addf %40, %42 : vector<8x128xf32>
    %c0_17 = arith.constant 0 : index
    %c0_18 = arith.constant 0 : index
    %44 = vector.load %arg5[%c0_17, %c0_18] : memref<8x128xf32, #tpu.memory_space<vmem>>, vector<8x128xf32>
    tpu.vector_store %arg5[%c0_17, %c0_18], %43 {strides = array<i32>} : memref<8x128xf32, #tpu.memory_space<vmem>>, vector<8x128xf32>,
    return
  }
  func.func @transform_0(%arg0: i32) -> (i32, i32) {
    %c0_i32 = arith.constant 0 : i32
    %c0_i32_0 = arith.constant 0 : i32
    return %arg0, %c0_i32 : i32, i32
  }
  func.func @transform_1(%arg0: i32) -> (i32, i32) {
    %c0_i32 = arith.constant 0 : i32
    %c0_i32_0 = arith.constant 0 : i32
    return %arg0, %c0_i32 : i32, i32
  }
  func.func @transform_2(%arg0: i32) -> (i32, i32) {
    %c0_i32 = arith.constant 0 : i32
    %c0_i32_0 = arith.constant 0 : i32
    %c0_i32_1 = arith.constant 0 : i32
    return %c0_i32, %c0_i32_0 : i32, i32
  }
  func.func @transform_3(%arg0: i32) -> (i32, i32) {
    %c0_i32 = arith.constant 0 : i32
    %c0_i32_0 = arith.constant 0 : i32
    %c0_i32_1 = arith.constant 0 : i32
    return %c0_i32, %c0_i32_0 : i32, i32
  }
  func.func @transform_4(%arg0: i32) -> (i32, i32) {
    %c0_i32 = arith.constant 0 : i32
    %c0_i32_0 = arith.constant 0 : i32
    return %arg0, %c0_i32 : i32, i32
  }
}

module attributes {stable_mosaic.version = 11 : i64} {
  func.func @_gan_kernel(%arg0: i32, %arg1: memref<8x128xf32, #tpu.memory_space<vmem>>, %arg2: memref<8x128xf32, #tpu.memory_space<vmem>>, %arg3: memref<128x256xf32, #tpu.memory_space<vmem>>, %arg4: memref<5x128xf32, #tpu.memory_space<vmem>>, %arg5: memref<8x128xf32, #tpu.memory_space<vmem>>) attributes {dimension_semantics = [#tpu.dimension_semantics<parallel>], iteration_bounds = array<i64: 2>, scalar_prefetch = 0 : i64, scratch_operands = 0 : i64, tpu.core_type = #tpu.core_type<tc>, window_params = [{transform_indices = @transform_0, window_bounds = array<i64: 8, 128>}, {transform_indices = @transform_1, window_bounds = array<i64: 8, 128>}, {pipeline_mode = #tpu.pipeline_mode<synchronous>, transform_indices = @transform_2, window_bounds = array<i64: 128, 256>}, {pipeline_mode = #tpu.pipeline_mode<synchronous>, transform_indices = @transform_3, window_bounds = array<i64: 5, 128>}, {transform_indices = @transform_4, window_bounds = array<i64: 8, 128>}]} {
    %c0 = arith.constant 0 : index
    %c0_0 = arith.constant 0 : index
    %0 = vector.load %arg1[%c0, %c0_0] : memref<8x128xf32, #tpu.memory_space<vmem>>, vector<8x128xf32>
    %c0_1 = arith.constant 0 : index
    %c0_2 = arith.constant 0 : index
    %1 = vector.load %arg3[%c0_1, %c0_2] : memref<128x256xf32, #tpu.memory_space<vmem>>, vector<128x256xf32>
    %cst = arith.constant dense<0.000000e+00> : vector<8x256xf32>
    %2 = tpu.matmul %0, %1, %cst {dimension_numbers = #tpu.dot_dimension_numbers<[1], [0], [0], [1], [0, 0, 1, 1], [], []>} : vector<8x128xf32>, vector<128x256xf32>, vector<8x256xf32> -> vector<8x256xf32>
    %c0_3 = arith.constant 0 : index
    %c0_4 = arith.constant 0 : index
    %3 = vector.load %arg2[%c0_3, %c0_4] : memref<8x128xf32, #tpu.memory_space<vmem>>, vector<8x128xf32>
    %4 = vector.extract_strided_slice %2 {offsets = [0, 0], sizes = [8, 128], strides = [1, 1]} : vector<8x256xf32> to vector<8x128xf32>
    %c0_5 = arith.constant 0 : index
    %c0_6 = arith.constant 0 : index
    %5 = vector.load %arg4[%c0_5, %c0_6] : memref<5x128xf32, #tpu.memory_space<vmem>>, vector<1x128xf32>
    %6 = vector.broadcast %5 : vector<1x128xf32> to vector<8x128xf32>
    %7 = arith.addf %4, %6 : vector<8x128xf32>
    %8 = vector.extract_strided_slice %2 {offsets = [0, 128], sizes = [8, 128], strides = [1, 1]} : vector<8x256xf32> to vector<8x128xf32>
    %c1 = arith.constant 1 : index
    %c0_7 = arith.constant 0 : index
    %9 = vector.load %arg4[%c1, %c0_7] : memref<5x128xf32, #tpu.memory_space<vmem>>, vector<1x128xf32>
    %10 = vector.broadcast %9 : vector<1x128xf32> to vector<8x128xf32>
    %11 = arith.addf %8, %10 : vector<8x128xf32>
    %12 = arith.negf %7 : vector<8x128xf32>
    %13 = math.exp %12 : vector<8x128xf32>
    %cst_8 = arith.constant 1.000000e+00 : f32
    %14 = vector.broadcast %cst_8 : f32 to vector<8x128xf32>
    %15 = arith.addf %14, %13 : vector<8x128xf32>
    %16 = arith.divf %14, %15 : vector<8x128xf32>
    %17 = arith.mulf %16, %11 : vector<8x128xf32>
    %18 = arith.addf %17, %3 : vector<8x128xf32>
    %cst_9 = arith.constant dense<0.000000e+00> : vector<8xf32>
    %19 = vector.multi_reduction <add>, %18, %cst_9 [1] : vector<8x128xf32> to vector<8xf32>
    %20 = vector.shape_cast %19 : vector<8xf32> to vector<8x1xf32>
    %cst_10 = arith.constant 3.125000e-02 : f32
    %21 = vector.broadcast %cst_10 : f32 to vector<8x1xf32>
    %22 = arith.mulf %20, %21 : vector<8x1xf32>
    %23 = vector.broadcast %22 : vector<8x1xf32> to vector<8x128xf32>
    %24 = arith.subf %18, %23 : vector<8x128xf32>
    %c4 = arith.constant 4 : index
    %c0_11 = arith.constant 0 : index
    %25 = vector.load %arg4[%c4, %c0_11] : memref<5x128xf32, #tpu.memory_space<vmem>>, vector<1x128xf32>
    %26 = vector.broadcast %25 : vector<1x128xf32> to vector<8x128xf32>
    %27 = arith.mulf %24, %26 : vector<8x128xf32>
    %28 = arith.mulf %27, %27 : vector<8x128xf32>
    %cst_12 = arith.constant dense<0.000000e+00> : vector<8xf32>
    %29 = vector.multi_reduction <add>, %28, %cst_12 [1] : vector<8x128xf32> to vector<8xf32>
    %30 = vector.shape_cast %29 : vector<8xf32> to vector<8x1xf32>
    %cst_13 = arith.constant 3.125000e-02 : f32
    %31 = vector.broadcast %cst_13 : f32 to vector<8x1xf32>
    %32 = arith.mulf %30, %31 : vector<8x1xf32>
    %cst_14 = arith.constant 9.99999974E-6 : f32
    %33 = vector.broadcast %cst_14 : f32 to vector<8x1xf32>
    %34 = arith.addf %32, %33 : vector<8x1xf32>
    %35 = math.rsqrt %34 : vector<8x1xf32>
    %36 = vector.broadcast %35 : vector<8x1xf32> to vector<8x128xf32>
    %37 = arith.mulf %24, %36 : vector<8x128xf32>
    %c2 = arith.constant 2 : index
    %c0_15 = arith.constant 0 : index
    %38 = vector.load %arg4[%c2, %c0_15] : memref<5x128xf32, #tpu.memory_space<vmem>>, vector<1x128xf32>
    %39 = vector.broadcast %38 : vector<1x128xf32> to vector<8x128xf32>
    %40 = arith.mulf %37, %39 : vector<8x128xf32>
    %c3 = arith.constant 3 : index
    %c0_16 = arith.constant 0 : index
    %41 = vector.load %arg4[%c3, %c0_16] : memref<5x128xf32, #tpu.memory_space<vmem>>, vector<1x128xf32>
    %42 = vector.broadcast %41 : vector<1x128xf32> to vector<8x128xf32>
    %43 = arith.addf %40, %42 : vector<8x128xf32>
    %c0_17 = arith.constant 0 : index
    %c0_18 = arith.constant 0 : index
    %44 = vector.load %arg5[%c0_17, %c0_18] : memref<8x128xf32, #tpu.memory_space<vmem>>, vector<8x128xf32>
    tpu.vector_store %arg5[%c0_17, %c0_18], %43 {strides = array<i32>} : memref<8x128xf32, #tpu.memory_space<vmem>>, vector<8x128xf32>,
    return
  }
  func.func @transform_0(%arg0: i32) -> (i32, i32) {
    %c0_i32 = arith.constant 0 : i32
    %c0_i32_0 = arith.constant 0 : i32
    return %arg0, %c0_i32 : i32, i32
  }
  func.func @transform_1(%arg0: i32) -> (i32, i32) {
    %c0_i32 = arith.constant 0 : i32
    %c0_i32_0 = arith.constant 0 : i32
    return %arg0, %c0_i32 : i32, i32
  }
  func.func @transform_2(%arg0: i32) -> (i32, i32) {
    %c0_i32 = arith.constant 0 : i32
    %c0_i32_0 = arith.constant 0 : i32
    %c0_i32_1 = arith.constant 0 : i32
    return %c0_i32, %c0_i32_0 : i32, i32
  }
  func.func @transform_3(%arg0: i32) -> (i32, i32) {
    %c0_i32 = arith.constant 0 : i32
    %c0_i32_0 = arith.constant 0 : i32
    %c0_i32_1 = arith.constant 0 : i32
    return %c0_i32, %c0_i32_0 : i32, i32
  }
  func.func @transform_4(%arg0: i32) -> (i32, i32) {
    %c0_i32 = arith.constant 0 : i32
    %c0_i32_0 = arith.constant 0 : i32
    return %arg0, %c0_i32 : i32, i32
  }
}

</mosaic_0001>

<llo_original>
// kernel: tpu_custom_call.1
$region0: #{tpu_custom_call.1}
  #allocation0 [shape = 'u32[]', space=smem, size = 0x4, offset = 0x4, fixed_abs, tag = 'smem constant byte address 0x4 - core index']
  #allocation1 [shape = 'u32[144,128]{1,0:T(1,128)}', space=vmem, size = 0x12000, scoped, tag = 'internal scratch']
  %s0 = inlined_call_operand.hbm [shape: f32[16,128], index: 0, kind: input, shape index: {}]
  %s1 = inlined_call_operand.hbm [shape: f32[16,128], index: 1, kind: input, shape index: {}]
  %s2 = inlined_call_operand.hbm [shape: f32[128,256], index: 2, kind: input, shape index: {}]
  %s3 = inlined_call_operand.hbm [shape: f32[5,128], index: 3, kind: input, shape index: {}]
  %s4 = inlined_call_operand.hbm [shape: f32[16,128], index: 4, kind: output, shape index: {}]
  %s5 = sld [smem:[#allocation0]]
  $region65: #{tpu_custom_call.1} parent=0
    _
  %s7 = ssub.s32 1, %s5
  %s8 = scalar_select 0, %s7, %s5
  $region1: #{tpu_custom_call.1} parent=0
    #allocation2 [shape = 'u8[8192]{0}', space=vmem, size = 0x2000, scoped, tag = 'input window, operand 0']
    #allocation3 [shape = 's32[2]{0}', space=sflag, size = 0x8, scoped, tag = 'scoped memory for tpu_custom_call.1']
    #allocation4 [shape = 's32[2]{0}', space=sflag, size = 0x8, scoped, tag = 'scoped memory for tpu_custom_call.1']
    #allocation5 [shape = 'u8[8192]{0}', space=vmem, size = 0x2000, scoped, tag = 'input window, operand 1']
    #allocation6 [shape = 's32[2]{0}', space=sflag, size = 0x8, scoped, tag = 'scoped memory for tpu_custom_call.1']
    #allocation7 [shape = 'u8[131072]{0}', space=vmem, size = 0x20000, scoped, tag = 'input window, operand 2, single buffered']
    #allocation8 [shape = 'u8[4096]{0}', space=vmem, size = 0x1000, scoped, tag = 'input window, operand 3, single buffered']
    #allocation9 [shape = 's32[1]{0}', space=sflag, size = 0x4, scoped, tag = 'scoped memory for tpu_custom_call.1']
    #allocation10 [shape = 'u8[8192]{0}', space=vmem, size = 0x2000, scoped, tag = 'output window, operand 0']
    %9 = vsyncpa [#allocation3], 0
    %s10 = scalar_lea.sflag [#allocation3], 1
    %11 = vsyncpa %s10, 0
    %12 = vsyncpa [#allocation6], 0
    %s13 = scalar_lea.sflag [#allocation6], 1
    %14 = vsyncpa %s13, 0
    %15 = vsyncpa [#allocation9], 0
    %16 = vsyncpa [#allocation4], 0
    %s17 = scalar_lea.sflag [#allocation4], 1
    %18 = vsyncpa %s17, 0
    loop: start=0, step=1, limit=4
    $region2: #{tpu_custom_call.1} parent=1 // loop_pre_header
      _
    $region3: #{tpu_custom_call.1} parent=1 // loop_header
      %s20 = sphi 0, %s24
      %p21 = scmp.ge.s32.totalorder %s20, 4
      %s30 = sphi 0, %s32
      %s33 = sphi 0, %s30
      %s34 = sphi 0, %s33
      %s50 = sphi 0, %s34
      %s56 = sphi 0, %s58
      %s59 = sphi 0, %s56
      %s60 = sphi 0, %s59
      %s76 = sphi 0, %s60
      %s80 = sphi 0, %s80
      %s82 = sphi 0, %s80
      %s83 = sphi 0, %s82
      %s97 = sphi 0, %s83
      %s101 = sphi 0, %s101
      %s103 = sphi 0, %s101
      %s104 = sphi 0, %s103
      %s118 = sphi 0, %s104
      %s124 = sphi 0, %s126
      %s127 = sphi 0, %s124
      %s128 = sphi 0, %s127
      %s144 = sphi 0, %s128
    $region4: #{tpu_custom_call.1} parent=1 // loop_header_branch
      %23 = sbr.rel (%p21) target = $region8
    $region5: #{tpu_custom_call.1} parent=1 // loop_body
      %s25 = ssub.s32 %s20, 1
      %s26 = ssub.s32 %s20, 2
      %s27 = sadd.s32 %s20, 1
      %s28 = ssub.s32 %s20, %s27
      %p29 = scmp.eq.s32.totalorder %s28, 0
      %s31 = sadd.s32 %s30, 1
      %s32 = scalar_select %p29, %s30, %s31
      %p35 = pneg %p29
      %p36 = scmp.eq.s32.totalorder %s20, 1
      %p37 = por %p35, %p36
      %p38 = scmp.ne.s32.totalorder %s30, %s33
      %p39 = scmp.eq.s32.totalorder %s20, 0
      %p40 = por %p38, %p39
      %p41 = scmp.ne.s32.totalorder %s30, %s33
      %p42 = scmp.eq.s32.totalorder %s25, 1
      %p43 = por %p41, %p42
      %p44 = scmp.ne.s32.totalorder %s33, %s34
      %p45 = scmp.eq.s32.totalorder %s25, 0
      %p46 = por %p44, %p45
      %p47 = scmp.ne.s32.totalorder %s33, %s34
      %p48 = scmp.eq.s32.totalorder %s26, 1
      %p49 = por %p47, %p48
      %p51 = scmp.ne.s32.totalorder %s34, %s50
      %p52 = scmp.eq.s32.totalorder %s26, 0
      %p53 = por %p51, %p52
      %s54 = ssub.s32 %s20, %s27
      %p55 = scmp.eq.s32.totalorder %s54, 0
      %s57 = sadd.s32 %s56, 1
      %s58 = scalar_select %p55, %s56, %s57
      %p61 = pneg %p55
      %p62 = scmp.eq.s32.totalorder %s20, 1
      %p63 = por %p61, %p62
      %p64 = scmp.ne.s32.totalorder %s56, %s59
      %p65 = scmp.eq.s32.totalorder %s20, 0
      %p66 = por %p64, %p65
      %p67 = scmp.ne.s32.totalorder %s56, %s59
      %p68 = scmp.eq.s32.totalorder %s25, 1
      %p69 = por %p67, %p68
      %p70 = scmp.ne.s32.totalorder %s59, %s60
      %p71 = scmp.eq.s32.totalorder %s25, 0
      %p72 = por %p70, %p71
      %p73 = scmp.ne.s32.totalorder %s59, %s60
      %p74 = scmp.eq.s32.totalorder %s26, 1
      %p75 = por %p73, %p74
      %p77 = scmp.ne.s32.totalorder %s60, %s76
      %p78 = scmp.eq.s32.totalorder %s26, 0
      %p79 = por %p77, %p78
      %s81 = sadd.s32 %s80, 1
      %p84 = scmp.eq.s32.totalorder %s20, 1
      %p85 = scmp.ne.s32.totalorder %s80, %s82
      %p86 = scmp.eq.s32.totalorder %s20, 0
      %p87 = por %p85, %p86
      %p88 = scmp.ne.s32.totalorder %s80, %s82
      %p89 = scmp.eq.s32.totalorder %s25, 1
      %p90 = por %p88, %p89
      %p91 = scmp.ne.s32.totalorder %s82, %s83
      %p92 = scmp.eq.s32.totalorder %s25, 0
      %p93 = por %p91, %p92
      %p94 = scmp.ne.s32.totalorder %s82, %s83
      %p95 = scmp.eq.s32.totalorder %s26, 1
      %p96 = por %p94, %p95
      %p98 = scmp.ne.s32.totalorder %s83, %s97
      %p99 = scmp.eq.s32.totalorder %s26, 0
      %p100 = por %p98, %p99
      %s102 = sadd.s32 %s101, 1
      %p105 = scmp.eq.s32.totalorder %s20, 1
      %p106 = scmp.ne.s32.totalorder %s101, %s103
      %p107 = scmp.eq.s32.totalorder %s20, 0
      %p108 = por %p106, %p107
      %p109 = scmp.ne.s32.totalorder %s101, %s103
      %p110 = scmp.eq.s32.totalorder %s25, 1
      %p111 = por %p109, %p110
      %p112 = scmp.ne.s32.totalorder %s103, %s104
      %p113 = scmp.eq.s32.totalorder %s25, 0
      %p114 = por %p112, %p113
      %p115 = scmp.ne.s32.totalorder %s103, %s104
      %p116 = scmp.eq.s32.totalorder %s26, 1
      %p117 = por %p115, %p116
      %p119 = scmp.ne.s32.totalorder %s104, %s118
      %p120 = scmp.eq.s32.totalorder %s26, 0
      %p121 = por %p119, %p120
      %s122 = ssub.s32 %s20, %s27
      %p123 = scmp.eq.s32.totalorder %s122, 0
      %s125 = sadd.s32 %s124, 1
      %s126 = scalar_select %p123, %s124, %s125
      %p129 = pneg %p123
      %p130 = scmp.eq.s32.totalorder %s20, 1
      %p131 = por %p129, %p130
      %p132 = scmp.ne.s32.totalorder %s124, %s127
      %p133 = scmp.eq.s32.totalorder %s20, 0
      %p134 = por %p132, %p133
      %p135 = scmp.ne.s32.totalorder %s124, %s127
      %p136 = scmp.eq.s32.totalorder %s25, 1
      %p137 = por %p135, %p136
      %p138 = scmp.ne.s32.totalorder %s127, %s128
      %p139 = scmp.eq.s32.totalorder %s25, 0
      %p140 = por %p138, %p139
      %p141 = scmp.ne.s32.totalorder %s127, %s128
      %p142 = scmp.eq.s32.totalorder %s26, 1
      %p143 = por %p141, %p142
      %p145 = scmp.ne.s32.totalorder %s128, %s144
      %p146 = scmp.eq.s32.totalorder %s26, 0
      %p147 = por %p145, %p146
      %p148 = scmp.le.s32.totalorder 1, %s20
      %p149 = scmp.lt.s32.totalorder %s20, 3
      %p150 = pnand %p148, %p149
      %p151 = pneg %p150
      // Predicated region
      $region9: #{tpu_custom_call.1} parent=5 // pred_check
        _
      $region10: #{tpu_custom_call.1} parent=5 // pred_check_branch
        %153 = sbr.rel (%p150) target = $region12
      $region11: #{tpu_custom_call.1} parent=5 // pred_region
        %s154 = ssub.s32 %s20, 1
        // Predicated region
        $region13: #{tpu_custom_call.1} parent=11 // pred_check
          %p155 = pneg %p93
        $region14: #{tpu_custom_call.1} parent=11 // pred_check_branch
          %157 = sbr.rel (%p155) target = $region16
        $region15: #{tpu_custom_call.1} parent=11 // pred_region
          %s159 = ssub.s32 4096, 4096
          %160 = vsyncadd [#allocation6], %s159
          %s161 = sshll.u32 [#allocation7], 4
          %s162 = int_to_ptr.vmem [resolvable:$true] %s161
          %167 = dma.hbm_to_vmem [thread:$0]  %s2, 4096, %s162, [#allocation6], 256, 256, 16
        $region16: #{tpu_custom_call.1} parent=11 // pred_fallthru
          _
        // Predicated region
        $region17: #{tpu_custom_call.1} parent=11 // pred_check
          %p168 = pneg %p114
        $region18: #{tpu_custom_call.1} parent=11 // pred_check_branch
          %170 = sbr.rel (%p168) target = $region20
        $region19: #{tpu_custom_call.1} parent=11 // pred_region
          %s172 = ssub.s32 128, 128
          %173 = vsyncadd [#allocation9], %s172
          %s175 = sshll.u32 [#allocation8], 4
          %s176 = int_to_ptr.vmem [resolvable:$true] %s175
          %178 = dma.hbm_to_vmem [thread:$0]  %s3, 128, %s176, [#allocation9]
        $region20: #{tpu_custom_call.1} parent=11 // pred_fallthru
          _
      $region12: #{tpu_custom_call.1} parent=5 // pred_fallthru
        _
      %p179 = scmp.lt.s32.totalorder %s20, 2
      // Predicated region
      $region21: #{tpu_custom_call.1} parent=5 // pred_check
        %p180 = pneg %p179
      $region22: #{tpu_custom_call.1} parent=5 // pred_check_branch
        %182 = sbr.rel (%p180) target = $region24
      $region23: #{tpu_custom_call.1} parent=5 // pred_region
        // Predicated region
        $region25: #{tpu_custom_call.1} parent=23 // pred_check
          %p183 = pneg %p40
        $region26: #{tpu_custom_call.1} parent=23 // pred_check_branch
          %185 = sbr.rel (%p183) target = $region28
        $region27: #{tpu_custom_call.1} parent=23 // pred_region
          %s186 = sand.u32 %s30, 1
          %s187 = scalar_lea.sflag [#allocation3], %s186
          %s188 = sand.u32 %s30, 1
          %s189 = smul.addr %s188, 8
          %s190 = scalar_lea.vmem [#allocation2], %s189
          %s192 = ssub.s32 128, 128
          %193 = vsyncadd %s187, %s192
          %s194 = smul.addr %s20, 128
          %s195 = scalar_lea.hbm %s0, %s194
          %s197 = sshll.u32 %s190, 4
          %s198 = int_to_ptr.vmem [resolvable:$true] %s197
          %200 = dma.hbm_to_vmem [thread:$0]  %s195, 128, %s198, %s187
        $region28: #{tpu_custom_call.1} parent=23 // pred_fallthru
          _
        // Predicated region
        $region29: #{tpu_custom_call.1} parent=23 // pred_check
          %p201 = pneg %p66
        $region30: #{tpu_custom_call.1} parent=23 // pred_check_branch
          %203 = sbr.rel (%p201) target = $region32
        $region31: #{tpu_custom_call.1} parent=23 // pred_region
          %s204 = sand.u32 %s20, 1
          %s205 = scalar_lea.sflag [#allocation6], %s204
          %s206 = sand.u32 %s56, 1
          %s207 = smul.addr %s206, 8
          %s208 = scalar_lea.vmem [#allocation5], %s207
          %s210 = ssub.s32 128, 128
          %211 = vsyncadd %s205, %s210
          %s212 = smul.addr %s20, 128
          %s213 = scalar_lea.hbm %s1, %s212
          %s215 = sshll.u32 %s208, 4
          %s216 = int_to_ptr.vmem [resolvable:$true] %s215
          %218 = dma.hbm_to_vmem [thread:$0]  %s213, 128, %s216, %s205
        $region32: #{tpu_custom_call.1} parent=23 // pred_fallthru
          _
      $region24: #{tpu_custom_call.1} parent=5 // pred_fallthru
        _
      %p219 = scmp.le.s32.totalorder 1, %s20
      %p220 = scmp.lt.s32.totalorder %s20, 3
      %p221 = pnand %p219, %p220
      %p222 = pneg %p221
      // Predicated region
      $region33: #{tpu_custom_call.1} parent=5 // pred_check
        _
      $region34: #{tpu_custom_call.1} parent=5 // pred_check_branch
        %224 = sbr.rel (%p221) target = $region36
      $region35: #{tpu_custom_call.1} parent=5 // pred_region
        %s225 = ssub.s32 %s20, 1
        %s226 = sand.u32 %s33, 1
        %s227 = scalar_lea.sflag [#allocation3], %s226
        %s228 = sand.u32 %s33, 1
        %s229 = smul.addr %s228, 8
        %s230 = scalar_lea.vmem [#allocation2], %s229
        // Predicated region
        $region37: #{tpu_custom_call.1} parent=35 // pred_check
          %p231 = pneg %p46
        $region38: #{tpu_custom_call.1} parent=35 // pred_check_branch
          %233 = sbr.rel (%p231) target = $region40
        $region39: #{tpu_custom_call.1} parent=35 // pred_region
          %234 = dma.done %s227, 128
        $region40: #{tpu_custom_call.1} parent=35 // pred_fallthru
          _
        %s235 = sand.u32 %s25, 1
        %s236 = scalar_lea.sflag [#allocation6], %s235
        %s237 = sand.u32 %s59, 1
        %s238 = smul.addr %s237, 8
        %s239 = scalar_lea.vmem [#allocation5], %s238
        // Predicated region
        $region41: #{tpu_custom_call.1} parent=35 // pred_check
          %p240 = pneg %p72
        $region42: #{tpu_custom_call.1} parent=35 // pred_check_branch
          %242 = sbr.rel (%p240) target = $region44
        $region43: #{tpu_custom_call.1} parent=35 // pred_region
          %243 = dma.done %s236, 128
        $region44: #{tpu_custom_call.1} parent=35 // pred_fallthru
          _
        // Predicated region
        $region45: #{tpu_custom_call.1} parent=35 // pred_check
          %p244 = pneg %p93
        $region46: #{tpu_custom_call.1} parent=35 // pred_check_branch
          %246 = sbr.rel (%p244) target = $region48
        $region47: #{tpu_custom_call.1} parent=35 // pred_region
          %247 = dma.done [#allocation6], 4096
        $region48: #{tpu_custom_call.1} parent=35 // pred_fallthru
          _
        // Predicated region
        $region49: #{tpu_custom_call.1} parent=35 // pred_check
          %p248 = pneg %p114
        $region50: #{tpu_custom_call.1} parent=35 // pred_check_branch
          %250 = sbr.rel (%p248) target = $region52
        $region51: #{tpu_custom_call.1} parent=35 // pred_region
          %251 = dma.done [#allocation9], 128
        $region52: #{tpu_custom_call.1} parent=35 // pred_fallthru
          _
        %s252 = sand.u32 %s33, 1
        %s253 = scalar_lea.sflag [#allocation3], %s252
        %s254 = sand.u32 %s33, 1
        %s255 = smul.addr %s254, 8
        %s256 = scalar_lea.vmem [#allocation2], %s255
        %p257 = pneg %p46
        %p258 = pneg %p43
        %s259 = sand.u32 %s25, 1
        %s260 = scalar_lea.sflag [#allocation6], %s259
        %s261 = sand.u32 %s59, 1
        %s262 = smul.addr %s261, 8
        %s263 = scalar_lea.vmem [#allocation5], %s262
        %p264 = pneg %p72
        %p265 = pneg %p69
        %p266 = pneg %p93
        %p267 = pneg %p90
        %p268 = pneg %p114
        %p269 = pneg %p111
        %p270 = pneg %p140
        %p271 = pneg %p137
        %s272 = sand.u32 %s127, 1
        %s273 = scalar_lea.sflag [#allocation4], %s272
        %s274 = sand.u32 %s127, 1
        %s275 = smul.addr %s274, 8
        %s276 = scalar_lea.vmem [#allocation10], %s275
        %v277 = vld [vmem:[%s230] sm:$0xff]
        %v278 = vld [vmem:[#allocation7] sm:$0xff]
        %v279 = vld [vmem:[#allocation7 + $0x8] sm:$0xff]
        %v280 = vld [vmem:[#allocation7 + $0x10] sm:$0xff]
        %v281 = vld [vmem:[#allocation7 + $0x18] sm:$0xff]
        %v282 = vld [vmem:[#allocation7 + $0x20] sm:$0xff]
        %v283 = vld [vmem:[#allocation7 + $0x28] sm:$0xff]
        %v284 = vld [vmem:[#allocation7 + $0x30] sm:$0xff]
        %v285 = vld [vmem:[#allocation7 + $0x38] sm:$0xff]
        %v286 = vld [vmem:[#allocation7 + $0x40] sm:$0xff]
        %v287 = vld [vmem:[#allocation7 + $0x48] sm:$0xff]
        %v288 = vld [vmem:[#allocation7 + $0x50] sm:$0xff]
        %v289 = vld [vmem:[#allocation7 + $0x58] sm:$0xff]
        %v290 = vld [vmem:[#allocation7 + $0x60] sm:$0xff]
        %v291 = vld [vmem:[#allocation7 + $0x68] sm:$0xff]
        %v292 = vld [vmem:[#allocation7 + $0x70] sm:$0xff]
        %v293 = vld [vmem:[#allocation7 + $0x78] sm:$0xff]
        %v294 = vld [vmem:[#allocation7 + $0x80] sm:$0xff]
        %v295 = vld [vmem:[#allocation7 + $0x88] sm:$0xff]
        %v296 = vld [vmem:[#allocation7 + $0x90] sm:$0xff]
        %v297 = vld [vmem:[#allocation7 + $0x98] sm:$0xff]
        %v298 = vld [vmem:[#allocation7 + $0xa0] sm:$0xff]
        %v299 = vld [vmem:[#allocation7 + $0xa8] sm:$0xff]
        %v300 = vld [vmem:[#allocation7 + $0xb0] sm:$0xff]
        %v301 = vld [vmem:[#allocation7 + $0xb8] sm:$0xff]
        %v302 = vld [vmem:[#allocation7 + $0xc0] sm:$0xff]
        %v303 = vld [vmem:[#allocation7 + $0xc8] sm:$0xff]
        %v304 = vld [vmem:[#allocation7 + $0xd0] sm:$0xff]
        %v305 = vld [vmem:[#allocation7 + $0xd8] sm:$0xff]
        %v306 = vld [vmem:[#allocation7 + $0xe0] sm:$0xff]
        %v307 = vld [vmem:[#allocation7 + $0xe8] sm:$0xff]
        %v308 = vld [vmem:[#allocation7 + $0xf0] sm:$0xff]
        %v309 = vld [vmem:[#allocation7 + $0xf8] sm:$0xff]
        %310 = vmatprep.subr.mxu0 %v309
        %311 = vmatpush1.msra.mxu0 %v308
        %312 = vmatprep.subr.mxu0 %v307
        %313 = vmatpush1.msra.mxu0 %v306
        %314 = vmatprep.subr.mxu0 %v305
        %315 = vmatpush1.msra.mxu0 %v304
        %316 = vmatprep.subr.mxu0 %v303
        %317 = vmatpush1.msra.mxu0 %v302
        %318 = vmatprep.subr.mxu0 %v301
        %319 = vmatpush1.msra.mxu0 %v300
        %320 = vmatprep.subr.mxu0 %v299
        %321 = vmatpush1.msra.mxu0 %v298
        %322 = vmatprep.subr.mxu0 %v297
        %323 = vmatpush1.msra.mxu0 %v296
        %324 = vmatprep.subr.mxu0 %v295
        %325 = vmatpush1.msra.mxu0 %v294
        %326 = vmatprep.subr.mxu0 %v293
        %327 = vmatpush1.msra.mxu0 %v292
        %328 = vmatprep.subr.mxu0 %v291
        %329 = vmatpush1.msra.mxu0 %v290
        %330 = vmatprep.subr.mxu0 %v289
        %331 = vmatpush1.msra.mxu0 %v288
        %332 = vmatprep.subr.mxu0 %v287
        %333 = vmatpush1.msra.mxu0 %v286
        %334 = vmatprep.subr.mxu0 %v285
        %335 = vmatpush1.msra.mxu0 %v284
        %336 = vmatprep.subr.mxu0 %v283
        %337 = vmatpush1.msra.mxu0 %v282
        %338 = vmatprep.subr.mxu0 %v281
        %339 = vmatpush1.msra.mxu0 %v280
        %340 = vmatprep.subr.mxu0 %v279
        %341 = vmatpush1.msra.mxu0 %v278
        %342 = vmatprep.subr.mxu0 0.0
        %343 = vmatpush2.msra.mxu0 0.0
        %344 = vmatprep.subr.mxu0 0.0
        %345 = vmatpush2.msra.mxu0 0.0
        %346 = vmatprep.subr.mxu0 0.0
        %347 = vmatpush2.msra.mxu0 0.0
        %348 = vmatprep.subr.mxu0 0.0
        %349 = vmatpush2.msra.mxu0 0.0
        %350 = vmatprep.subr.mxu0 0.0
        %351 = vmatpush2.msra.mxu0 0.0
        %352 = vmatprep.subr.mxu0 0.0
        %353 = vmatpush2.msra.mxu0 0.0
        %354 = vmatprep.subr.mxu0 0.0
        %355 = vmatpush2.msra.mxu0 0.0
        %356 = vmatprep.subr.mxu0 0.0
        %357 = vmatpush2.msra.mxu0 0.0
        %358 = vmatprep.subr.mxu0 0.0
        %359 = vmatpush2.msra.mxu0 0.0
        %360 = vmatprep.subr.mxu0 0.0
        %361 = vmatpush2.msra.mxu0 0.0
        %362 = vmatprep.subr.mxu0 0.0
        %363 = vmatpush2.msra.mxu0 0.0
        %364 = vmatprep.subr.mxu0 0.0
        %365 = vmatpush2.msra.mxu0 0.0
        %366 = vmatprep.subr.mxu0 0.0
        %367 = vmatpush2.msra.mxu0 0.0
        %368 = vmatprep.subr.mxu0 0.0
        %369 = vmatpush2.msra.mxu0 0.0
        %370 = vmatprep.subr.mxu0 0.0
        %371 = vmatpush2.msra.mxu0 0.0
        %372 = vmatprep.subr.mxu0 0.0
        %373 = vmatpush2.msra.mxu0 0.0
        %374 = vmatprep.mubr.f32.mxu0 0.0
        %375 = vmatmul.mubr.f32.gmra.mxu0 %v277
        %v376 = vpop.f32.mrf.mxu0
        %v377 = vadd.f32 0.0, %v376
        %v378 = vpop.f32.mrf.mxu0
        %v379 = vadd.f32 0.0, %v378
        %380 = vdwg.mxu0
        %v381 = vld [vmem:[%s239] sm:$0xff]
        %v382 = vld [vmem:[#allocation8] sm:$0x1]
        %v383 = vlaneseq
        %v384 = vshrl.u32 %v383, 7
        %v385 = vsub.s32 0, %v384
        %v386 = vrot.slane %v382, %v385
        %v387 = vadd.f32 %v377, %v386
        %v388 = vld [vmem:[#allocation8 + $0x1] sm:$0x1]
        %v389 = vlaneseq
        %v390 = vshrl.u32 %v389, 7
        %v391 = vsub.s32 0, %v390
        %v392 = vrot.slane %v388, %v391
        %v393 = vadd.f32 %v379, %v392
        %v394 = vxor.u32 %v387, 2147483648
        %v395 = vmul.f32 %v394, 1.442695
        %v396 = vpow.pop %v395
        %v397 = vadd.f32 %v396, 1.0
        %v398 = vrcp.pop %v397
        %v399 = vmul.f32 1.0, %v398
        %v400 = vmul.f32 %v399, %v393
        %v401 = vadd.f32 %v400, %v381
        %402 = vadd.xlane.f32.xlu0 %v401
        %v403 = vpop.xlane.xlu0 %402
        %v404 = vmul.f32 %v403, 0.03125
        %v405 = vsub.f32 %v401, %v404
        %v406 = vld [vmem:[#allocation8 + $0x4] sm:$0x1]
        %v407 = vlaneseq
        %v408 = vshrl.u32 %v407, 7
        %v409 = vsub.s32 0, %v408
        %v410 = vrot.slane %v406, %v409
        %v411 = vmul.f32 %v405, %v410
        %v412 = vmul.f32 %v411, %v411
        %413 = vadd.xlane.f32.xlu0 %v412
        %v414 = vpop.xlane.xlu0 %413
        %v415 = vmul.f32 %v414, 0.03125
        %v416 = vadd.f32 %v415, 1e-05
        %v417 = vrsqrt.pop %v416
        %v418 = vmul.f32 %v405, %v417
        %v419 = vld [vmem:[#allocation8 + $0x2] sm:$0x1]
        %v420 = vlaneseq
        %v421 = vshrl.u32 %v420, 7
        %v422 = vsub.s32 0, %v421
        %v423 = vrot.slane %v419, %v422
        %v424 = vmul.f32 %v418, %v423
        %v425 = vld [vmem:[#allocation8 + $0x3] sm:$0x1]
        %v426 = vlaneseq
        %v427 = vshrl.u32 %v426, 7
        %v428 = vsub.s32 0, %v427
        %v429 = vrot.slane %v425, %v428
        %v430 = vadd.f32 %v424, %v429
        %431 = vst [vmem:[%s276] sm:$0xff] %v430
        %s432 = sand.u32 %s127, 1
        %s433 = scalar_lea.sflag [#allocation4], %s432
        %s434 = sand.u32 %s127, 1
        %s435 = smul.addr %s434, 8
        %s436 = scalar_lea.vmem [#allocation10], %s435
        // Predicated region
        $region53: #{tpu_custom_call.1} parent=35 // pred_check
          %p437 = pneg %p137
        $region54: #{tpu_custom_call.1} parent=35 // pred_check_branch
          %439 = sbr.rel (%p437) target = $region56
        $region55: #{tpu_custom_call.1} parent=35 // pred_region
          %s441 = ssub.s32 128, 128
          %442 = vsyncadd %s433, %s441
          %s443 = smul.addr %s25, 128
          %s444 = scalar_lea.hbm %s4, %s443
          %s446 = sshll.u32 %s436, 4
          %s447 = int_to_ptr.vmem [resolvable:$true] %s446
          %449 = dma.vmem_to_hbm [thread:$0]  %s447, 128, %s444, %s433
        $region56: #{tpu_custom_call.1} parent=35 // pred_fallthru
          _
      $region36: #{tpu_custom_call.1} parent=5 // pred_fallthru
        _
      %p450 = scmp.le.s32.totalorder 2, %s20
      // Predicated region
      $region57: #{tpu_custom_call.1} parent=5 // pred_check
        %p451 = pneg %p450
      $region58: #{tpu_custom_call.1} parent=5 // pred_check_branch
        %453 = sbr.rel (%p451) target = $region60
      $region59: #{tpu_custom_call.1} parent=5 // pred_region
        %s454 = ssub.s32 %s20, 2
        // Predicated region
        $region61: #{tpu_custom_call.1} parent=59 // pred_check
          %p455 = pneg %p143
        $region62: #{tpu_custom_call.1} parent=59 // pred_check_branch
          %457 = sbr.rel (%p455) target = $region64
        $region63: #{tpu_custom_call.1} parent=59 // pred_region
          %s458 = sand.u32 %s128, 1
          %s459 = scalar_lea.sflag [#allocation4], %s458
          %s460 = sand.u32 %s128, 1
          %s461 = smul.addr %s460, 8
          %s462 = scalar_lea.vmem [#allocation10], %s461
          %463 = dma.done %s459, 128
        $region64: #{tpu_custom_call.1} parent=59 // pred_fallthru
          _
      $region60: #{tpu_custom_call.1} parent=5 // pred_fallthru
        _
    $region6: #{tpu_custom_call.1} parent=1 // loop_footer
      %s24 = sadd.s32 1, %s20
    $region7: #{tpu_custom_call.1} parent=1 // loop_footer_branch
      %19 = sbr.rel target = $region3
    $region8: #{tpu_custom_call.1} parent=1 // loop_exit
      _
    %464 = vsyncpa [#allocation3], 1
    %s465 = scalar_lea.sflag [#allocation3], 1
    %466 = vsyncpa %s465, 1
    %467 = vsyncpa [#allocation6], 1
    %s468 = scalar_lea.sflag [#allocation6], 1
    %469 = vsyncpa %s468, 1
    %470 = vsyncpa [#allocation9], 1
    %471 = vsyncpa [#allocation4], 1
    %s472 = scalar_lea.sflag [#allocation4], 1
    %473 = vsyncpa %s472, 1

// kernel: tpu_custom_call.1
$region0: #{tpu_custom_call.1}
  #allocation0 [shape = 'u32[]', space=smem, size = 0x4, offset = 0x4, fixed_abs, tag = 'smem constant byte address 0x4 - core index']
  #allocation1 [shape = 'u32[144,128]{1,0:T(1,128)}', space=vmem, size = 0x12000, scoped, tag = 'internal scratch']
  %s0 = inlined_call_operand.hbm [shape: f32[16,128], index: 0, kind: input, shape index: {}]
  %s1 = inlined_call_operand.hbm [shape: f32[16,128], index: 1, kind: input, shape index: {}]
  %s2 = inlined_call_operand.hbm [shape: f32[128,256], index: 2, kind: input, shape index: {}]
  %s3 = inlined_call_operand.hbm [shape: f32[5,128], index: 3, kind: input, shape index: {}]
  %s4 = inlined_call_operand.hbm [shape: f32[16,128], index: 4, kind: output, shape index: {}]
  %s5 = sld [smem:[#allocation0]]
  $region65: #{tpu_custom_call.1} parent=0
    _
  %s7 = ssub.s32 1, %s5
  %s8 = scalar_select 0, %s7, %s5
  $region1: #{tpu_custom_call.1} parent=0
    #allocation2 [shape = 'u8[8192]{0}', space=vmem, size = 0x2000, scoped, tag = 'input window, operand 0']
    #allocation3 [shape = 's32[2]{0}', space=sflag, size = 0x8, scoped, tag = 'scoped memory for tpu_custom_call.1']
    #allocation4 [shape = 's32[2]{0}', space=sflag, size = 0x8, scoped, tag = 'scoped memory for tpu_custom_call.1']
    #allocation5 [shape = 'u8[8192]{0}', space=vmem, size = 0x2000, scoped, tag = 'input window, operand 1']
    #allocation6 [shape = 's32[2]{0}', space=sflag, size = 0x8, scoped, tag = 'scoped memory for tpu_custom_call.1']
    #allocation7 [shape = 'u8[131072]{0}', space=vmem, size = 0x20000, scoped, tag = 'input window, operand 2, single buffered']
    #allocation8 [shape = 'u8[4096]{0}', space=vmem, size = 0x1000, scoped, tag = 'input window, operand 3, single buffered']
    #allocation9 [shape = 's32[1]{0}', space=sflag, size = 0x4, scoped, tag = 'scoped memory for tpu_custom_call.1']
    #allocation10 [shape = 'u8[8192]{0}', space=vmem, size = 0x2000, scoped, tag = 'output window, operand 0']
    %9 = vsyncpa [#allocation3], 0
    %s10 = scalar_lea.sflag [#allocation3], 1
    %11 = vsyncpa %s10, 0
    %12 = vsyncpa [#allocation6], 0
    %s13 = scalar_lea.sflag [#allocation6], 1
    %14 = vsyncpa %s13, 0
    %15 = vsyncpa [#allocation9], 0
    %16 = vsyncpa [#allocation4], 0
    %s17 = scalar_lea.sflag [#allocation4], 1
    %18 = vsyncpa %s17, 0
    loop: start=0, step=1, limit=4
    $region2: #{tpu_custom_call.1} parent=1 // loop_pre_header
      _
    $region3: #{tpu_custom_call.1} parent=1 // loop_header
      %s20 = sphi 0, %s24
      %p21 = scmp.ge.s32.totalorder %s20, 4
      %s30 = sphi 0, %s32
      %s33 = sphi 0, %s30
      %s34 = sphi 0, %s33
      %s50 = sphi 0, %s34
      %s56 = sphi 0, %s58
      %s59 = sphi 0, %s56
      %s60 = sphi 0, %s59
      %s76 = sphi 0, %s60
      %s80 = sphi 0, %s80
      %s82 = sphi 0, %s80
      %s83 = sphi 0, %s82
      %s97 = sphi 0, %s83
      %s101 = sphi 0, %s101
      %s103 = sphi 0, %s101
      %s104 = sphi 0, %s103
      %s118 = sphi 0, %s104
      %s124 = sphi 0, %s126
      %s127 = sphi 0, %s124
      %s128 = sphi 0, %s127
      %s144 = sphi 0, %s128
    $region4: #{tpu_custom_call.1} parent=1 // loop_header_branch
      %23 = sbr.rel (%p21) target = $region8
    $region5: #{tpu_custom_call.1} parent=1 // loop_body
      %s25 = ssub.s32 %s20, 1
      %s26 = ssub.s32 %s20, 2
      %s27 = sadd.s32 %s20, 1
      %s28 = ssub.s32 %s20, %s27
      %p29 = scmp.eq.s32.totalorder %s28, 0
      %s31 = sadd.s32 %s30, 1
      %s32 = scalar_select %p29, %s30, %s31
      %p35 = pneg %p29
      %p36 = scmp.eq.s32.totalorder %s20, 1
      %p37 = por %p35, %p36
      %p38 = scmp.ne.s32.totalorder %s30, %s33
      %p39 = scmp.eq.s32.totalorder %s20, 0
      %p40 = por %p38, %p39
      %p41 = scmp.ne.s32.totalorder %s30, %s33
      %p42 = scmp.eq.s32.totalorder %s25, 1
      %p43 = por %p41, %p42
      %p44 = scmp.ne.s32.totalorder %s33, %s34
      %p45 = scmp.eq.s32.totalorder %s25, 0
      %p46 = por %p44, %p45
      %p47 = scmp.ne.s32.totalorder %s33, %s34
      %p48 = scmp.eq.s32.totalorder %s26, 1
      %p49 = por %p47, %p48
      %p51 = scmp.ne.s32.totalorder %s34, %s50
      %p52 = scmp.eq.s32.totalorder %s26, 0
      %p53 = por %p51, %p52
      %s54 = ssub.s32 %s20, %s27
      %p55 = scmp.eq.s32.totalorder %s54, 0
      %s57 = sadd.s32 %s56, 1
      %s58 = scalar_select %p55, %s56, %s57
      %p61 = pneg %p55
      %p62 = scmp.eq.s32.totalorder %s20, 1
      %p63 = por %p61, %p62
      %p64 = scmp.ne.s32.totalorder %s56, %s59
      %p65 = scmp.eq.s32.totalorder %s20, 0
      %p66 = por %p64, %p65
      %p67 = scmp.ne.s32.totalorder %s56, %s59
      %p68 = scmp.eq.s32.totalorder %s25, 1
      %p69 = por %p67, %p68
      %p70 = scmp.ne.s32.totalorder %s59, %s60
      %p71 = scmp.eq.s32.totalorder %s25, 0
      %p72 = por %p70, %p71
      %p73 = scmp.ne.s32.totalorder %s59, %s60
      %p74 = scmp.eq.s32.totalorder %s26, 1
      %p75 = por %p73, %p74
      %p77 = scmp.ne.s32.totalorder %s60, %s76
      %p78 = scmp.eq.s32.totalorder %s26, 0
      %p79 = por %p77, %p78
      %s81 = sadd.s32 %s80, 1
      %p84 = scmp.eq.s32.totalorder %s20, 1
      %p85 = scmp.ne.s32.totalorder %s80, %s82
      %p86 = scmp.eq.s32.totalorder %s20, 0
      %p87 = por %p85, %p86
      %p88 = scmp.ne.s32.totalorder %s80, %s82
      %p89 = scmp.eq.s32.totalorder %s25, 1
      %p90 = por %p88, %p89
      %p91 = scmp.ne.s32.totalorder %s82, %s83
      %p92 = scmp.eq.s32.totalorder %s25, 0
      %p93 = por %p91, %p92
      %p94 = scmp.ne.s32.totalorder %s82, %s83
      %p95 = scmp.eq.s32.totalorder %s26, 1
      %p96 = por %p94, %p95
      %p98 = scmp.ne.s32.totalorder %s83, %s97
      %p99 = scmp.eq.s32.totalorder %s26, 0
      %p100 = por %p98, %p99
      %s102 = sadd.s32 %s101, 1
      %p105 = scmp.eq.s32.totalorder %s20, 1
      %p106 = scmp.ne.s32.totalorder %s101, %s103
      %p107 = scmp.eq.s32.totalorder %s20, 0
      %p108 = por %p106, %p107
      %p109 = scmp.ne.s32.totalorder %s101, %s103
      %p110 = scmp.eq.s32.totalorder %s25, 1
      %p111 = por %p109, %p110
      %p112 = scmp.ne.s32.totalorder %s103, %s104
      %p113 = scmp.eq.s32.totalorder %s25, 0
      %p114 = por %p112, %p113
      %p115 = scmp.ne.s32.totalorder %s103, %s104
      %p116 = scmp.eq.s32.totalorder %s26, 1
      %p117 = por %p115, %p116
      %p119 = scmp.ne.s32.totalorder %s104, %s118
      %p120 = scmp.eq.s32.totalorder %s26, 0
      %p121 = por %p119, %p120
      %s122 = ssub.s32 %s20, %s27
      %p123 = scmp.eq.s32.totalorder %s122, 0
      %s125 = sadd.s32 %s124, 1
      %s126 = scalar_select %p123, %s124, %s125
      %p129 = pneg %p123
      %p130 = scmp.eq.s32.totalorder %s20, 1
      %p131 = por %p129, %p130
      %p132 = scmp.ne.s32.totalorder %s124, %s127
      %p133 = scmp.eq.s32.totalorder %s20, 0
      %p134 = por %p132, %p133
      %p135 = scmp.ne.s32.totalorder %s124, %s127
      %p136 = scmp.eq.s32.totalorder %s25, 1
      %p137 = por %p135, %p136
      %p138 = scmp.ne.s32.totalorder %s127, %s128
      %p139 = scmp.eq.s32.totalorder %s25, 0
      %p140 = por %p138, %p139
      %p141 = scmp.ne.s32.totalorder %s127, %s128
      %p142 = scmp.eq.s32.totalorder %s26, 1
      %p143 = por %p141, %p142
      %p145 = scmp.ne.s32.totalorder %s128, %s144
      %p146 = scmp.eq.s32.totalorder %s26, 0
      %p147 = por %p145, %p146
      %p148 = scmp.le.s32.totalorder 1, %s20
      %p149 = scmp.lt.s32.totalorder %s20, 3
      %p150 = pnand %p148, %p149
      %p151 = pneg %p150
      // Predicated region
      $region9: #{tpu_custom_call.1} parent=5 // pred_check
        _
      $region10: #{tpu_custom_call.1} parent=5 // pred_check_branch
        %153 = sbr.rel (%p150) target = $region12
      $region11: #{tpu_custom_call.1} parent=5 // pred_region
        %s154 = ssub.s32 %s20, 1
        // Predicated region
        $region13: #{tpu_custom_call.1} parent=11 // pred_check
          %p155 = pneg %p93
        $region14: #{tpu_custom_call.1} parent=11 // pred_check_branch
          %157 = sbr.rel (%p155) target = $region16
        $region15: #{tpu_custom_call.1} parent=11 // pred_region
          %s159 = ssub.s32 4096, 4096
          %160 = vsyncadd [#allocation6], %s159
          %s161 = sshll.u32 [#allocation7], 4
          %s162 = int_to_ptr.vmem [resolvable:$true] %s161
          %167 = dma.hbm_to_vmem [thread:$0]  %s2, 4096, %s162, [#allocation6], 256, 256, 16
        $region16: #{tpu_custom_call.1} parent=11 // pred_fallthru
          _
        // Predicated region
        $region17: #{tpu_custom_call.1} parent=11 // pred_check
          %p168 = pneg %p114
        $region18: #{tpu_custom_call.1} parent=11 // pred_check_branch
          %170 = sbr.rel (%p168) target = $region20
        $region19: #{tpu_custom_call.1} parent=11 // pred_region
          %s172 = ssub.s32 128, 128
          %173 = vsyncadd [#allocation9], %s172
          %s175 = sshll.u32 [#allocation8], 4
          %s176 = int_to_ptr.vmem [resolvable:$true] %s175
          %178 = dma.hbm_to_vmem [thread:$0]  %s3, 128, %s176, [#allocation9]
        $region20: #{tpu_custom_call.1} parent=11 // pred_fallthru
          _
      $region12: #{tpu_custom_call.1} parent=5 // pred_fallthru
        _
      %p179 = scmp.lt.s32.totalorder %s20, 2
      // Predicated region
      $region21: #{tpu_custom_call.1} parent=5 // pred_check
        %p180 = pneg %p179
      $region22: #{tpu_custom_call.1} parent=5 // pred_check_branch
        %182 = sbr.rel (%p180) target = $region24
      $region23: #{tpu_custom_call.1} parent=5 // pred_region
        // Predicated region
        $region25: #{tpu_custom_call.1} parent=23 // pred_check
          %p183 = pneg %p40
        $region26: #{tpu_custom_call.1} parent=23 // pred_check_branch
          %185 = sbr.rel (%p183) target = $region28
        $region27: #{tpu_custom_call.1} parent=23 // pred_region
          %s186 = sand.u32 %s30, 1
          %s187 = scalar_lea.sflag [#allocation3], %s186
          %s188 = sand.u32 %s30, 1
          %s189 = smul.addr %s188, 8
          %s190 = scalar_lea.vmem [#allocation2], %s189
          %s192 = ssub.s32 128, 128
          %193 = vsyncadd %s187, %s192
          %s194 = smul.addr %s20, 128
          %s195 = scalar_lea.hbm %s0, %s194
          %s197 = sshll.u32 %s190, 4
          %s198 = int_to_ptr.vmem [resolvable:$true] %s197
          %200 = dma.hbm_to_vmem [thread:$0]  %s195, 128, %s198, %s187
        $region28: #{tpu_custom_call.1} parent=23 // pred_fallthru
          _
        // Predicated region
        $region29: #{tpu_custom_call.1} parent=23 // pred_check
          %p201 = pneg %p66
        $region30: #{tpu_custom_call.1} parent=23 // pred_check_branch
          %203 = sbr.rel (%p201) target = $region32
        $region31: #{tpu_custom_call.1} parent=23 // pred_region
          %s204 = sand.u32 %s20, 1
          %s205 = scalar_lea.sflag [#allocation6], %s204
          %s206 = sand.u32 %s56, 1
          %s207 = smul.addr %s206, 8
          %s208 = scalar_lea.vmem [#allocation5], %s207
          %s210 = ssub.s32 128, 128
          %211 = vsyncadd %s205, %s210
          %s212 = smul.addr %s20, 128
          %s213 = scalar_lea.hbm %s1, %s212
          %s215 = sshll.u32 %s208, 4
          %s216 = int_to_ptr.vmem [resolvable:$true] %s215
          %218 = dma.hbm_to_vmem [thread:$0]  %s213, 128, %s216, %s205
        $region32: #{tpu_custom_call.1} parent=23 // pred_fallthru
          _
      $region24: #{tpu_custom_call.1} parent=5 // pred_fallthru
        _
      %p219 = scmp.le.s32.totalorder 1, %s20
      %p220 = scmp.lt.s32.totalorder %s20, 3
      %p221 = pnand %p219, %p220
      %p222 = pneg %p221
      // Predicated region
      $region33: #{tpu_custom_call.1} parent=5 // pred_check
        _
      $region34: #{tpu_custom_call.1} parent=5 // pred_check_branch
        %224 = sbr.rel (%p221) target = $region36
      $region35: #{tpu_custom_call.1} parent=5 // pred_region
        %s225 = ssub.s32 %s20, 1
        %s226 = sand.u32 %s33, 1
        %s227 = scalar_lea.sflag [#allocation3], %s226
        %s228 = sand.u32 %s33, 1
        %s229 = smul.addr %s228, 8
        %s230 = scalar_lea.vmem [#allocation2], %s229
        // Predicated region
        $region37: #{tpu_custom_call.1} parent=35 // pred_check
          %p231 = pneg %p46
        $region38: #{tpu_custom_call.1} parent=35 // pred_check_branch
          %233 = sbr.rel (%p231) target = $region40
        $region39: #{tpu_custom_call.1} parent=35 // pred_region
          %234 = dma.done %s227, 128
        $region40: #{tpu_custom_call.1} parent=35 // pred_fallthru
          _
        %s235 = sand.u32 %s25, 1
        %s236 = scalar_lea.sflag [#allocation6], %s235
        %s237 = sand.u32 %s59, 1
        %s238 = smul.addr %s237, 8
        %s239 = scalar_lea.vmem [#allocation5], %s238
        // Predicated region
        $region41: #{tpu_custom_call.1} parent=35 // pred_check
          %p240 = pneg %p72
        $region42: #{tpu_custom_call.1} parent=35 // pred_check_branch
          %242 = sbr.rel (%p240) target = $region44
        $region43: #{tpu_custom_call.1} parent=35 // pred_region
          %243 = dma.done %s236, 128
        $region44: #{tpu_custom_call.1} parent=35 // pred_fallthru
          _
        // Predicated region
        $region45: #{tpu_custom_call.1} parent=35 // pred_check
          %p244 = pneg %p93
        $region46: #{tpu_custom_call.1} parent=35 // pred_check_branch
          %246 = sbr.rel (%p244) target = $region48
        $region47: #{tpu_custom_call.1} parent=35 // pred_region
          %247 = dma.done [#allocation6], 4096
        $region48: #{tpu_custom_call.1} parent=35 // pred_fallthru
          _
        // Predicated region
        $region49: #{tpu_custom_call.1} parent=35 // pred_check
          %p248 = pneg %p114
        $region50: #{tpu_custom_call.1} parent=35 // pred_check_branch
          %250 = sbr.rel (%p248) target = $region52
        $region51: #{tpu_custom_call.1} parent=35 // pred_region
          %251 = dma.done [#allocation9], 128
        $region52: #{tpu_custom_call.1} parent=35 // pred_fallthru
          _
        %s252 = sand.u32 %s33, 1
        %s253 = scalar_lea.sflag [#allocation3], %s252
        %s254 = sand.u32 %s33, 1
        %s255 = smul.addr %s254, 8
        %s256 = scalar_lea.vmem [#allocation2], %s255
        %p257 = pneg %p46
        %p258 = pneg %p43
        %s259 = sand.u32 %s25, 1
        %s260 = scalar_lea.sflag [#allocation6], %s259
        %s261 = sand.u32 %s59, 1
        %s262 = smul.addr %s261, 8
        %s263 = scalar_lea.vmem [#allocation5], %s262
        %p264 = pneg %p72
        %p265 = pneg %p69
        %p266 = pneg %p93
        %p267 = pneg %p90
        %p268 = pneg %p114
        %p269 = pneg %p111
        %p270 = pneg %p140
        %p271 = pneg %p137
        %s272 = sand.u32 %s127, 1
        %s273 = scalar_lea.sflag [#allocation4], %s272
        %s274 = sand.u32 %s127, 1
        %s275 = smul.addr %s274, 8
        %s276 = scalar_lea.vmem [#allocation10], %s275
        %v277 = vld [vmem:[%s230] sm:$0xff]
        %v278 = vld [vmem:[#allocation7] sm:$0xff]
        %v279 = vld [vmem:[#allocation7 + $0x8] sm:$0xff]
        %v280 = vld [vmem:[#allocation7 + $0x10] sm:$0xff]
        %v281 = vld [vmem:[#allocation7 + $0x18] sm:$0xff]
        %v282 = vld [vmem:[#allocation7 + $0x20] sm:$0xff]
        %v283 = vld [vmem:[#allocation7 + $0x28] sm:$0xff]
        %v284 = vld [vmem:[#allocation7 + $0x30] sm:$0xff]
        %v285 = vld [vmem:[#allocation7 + $0x38] sm:$0xff]
        %v286 = vld [vmem:[#allocation7 + $0x40] sm:$0xff]
        %v287 = vld [vmem:[#allocation7 + $0x48] sm:$0xff]
        %v288 = vld [vmem:[#allocation7 + $0x50] sm:$0xff]
        %v289 = vld [vmem:[#allocation7 + $0x58] sm:$0xff]
        %v290 = vld [vmem:[#allocation7 + $0x60] sm:$0xff]
        %v291 = vld [vmem:[#allocation7 + $0x68] sm:$0xff]
        %v292 = vld [vmem:[#allocation7 + $0x70] sm:$0xff]
        %v293 = vld [vmem:[#allocation7 + $0x78] sm:$0xff]
        %v294 = vld [vmem:[#allocation7 + $0x80] sm:$0xff]
        %v295 = vld [vmem:[#allocation7 + $0x88] sm:$0xff]
        %v296 = vld [vmem:[#allocation7 + $0x90] sm:$0xff]
        %v297 = vld [vmem:[#allocation7 + $0x98] sm:$0xff]
        %v298 = vld [vmem:[#allocation7 + $0xa0] sm:$0xff]
        %v299 = vld [vmem:[#allocation7 + $0xa8] sm:$0xff]
        %v300 = vld [vmem:[#allocation7 + $0xb0] sm:$0xff]
        %v301 = vld [vmem:[#allocation7 + $0xb8] sm:$0xff]
        %v302 = vld [vmem:[#allocation7 + $0xc0] sm:$0xff]
        %v303 = vld [vmem:[#allocation7 + $0xc8] sm:$0xff]
        %v304 = vld [vmem:[#allocation7 + $0xd0] sm:$0xff]
        %v305 = vld [vmem:[#allocation7 + $0xd8] sm:$0xff]
        %v306 = vld [vmem:[#allocation7 + $0xe0] sm:$0xff]
        %v307 = vld [vmem:[#allocation7 + $0xe8] sm:$0xff]
        %v308 = vld [vmem:[#allocation7 + $0xf0] sm:$0xff]
        %v309 = vld [vmem:[#allocation7 + $0xf8] sm:$0xff]
        %310 = vmatprep.subr.mxu0 %v309
        %311 = vmatpush1.msra.mxu0 %v308
        %312 = vmatprep.subr.mxu0 %v307
        %313 = vmatpush1.msra.mxu0 %v306
        %314 = vmatprep.subr.mxu0 %v305
        %315 = vmatpush1.msra.mxu0 %v304
        %316 = vmatprep.subr.mxu0 %v303
        %317 = vmatpush1.msra.mxu0 %v302
        %318 = vmatprep.subr.mxu0 %v301
        %319 = vmatpush1.msra.mxu0 %v300
        %320 = vmatprep.subr.mxu0 %v299
        %321 = vmatpush1.msra.mxu0 %v298
        %322 = vmatprep.subr.mxu0 %v297
        %323 = vmatpush1.msra.mxu0 %v296
        %324 = vmatprep.subr.mxu0 %v295
        %325 = vmatpush1.msra.mxu0 %v294
        %326 = vmatprep.subr.mxu0 %v293
        %327 = vmatpush1.msra.mxu0 %v292
        %328 = vmatprep.subr.mxu0 %v291
        %329 = vmatpush1.msra.mxu0 %v290
        %330 = vmatprep.subr.mxu0 %v289
        %331 = vmatpush1.msra.mxu0 %v288
        %332 = vmatprep.subr.mxu0 %v287
        %333 = vmatpush1.msra.mxu0 %v286
        %334 = vmatprep.subr.mxu0 %v285
        %335 = vmatpush1.msra.mxu0 %v284
        %336 = vmatprep.subr.mxu0 %v283
        %337 = vmatpush1.msra.mxu0 %v282
        %338 = vmatprep.subr.mxu0 %v281
        %339 = vmatpush1.msra.mxu0 %v280
        %340 = vmatprep.subr.mxu0 %v279
        %341 = vmatpush1.msra.mxu0 %v278
        %342 = vmatprep.subr.mxu0 0.0
        %343 = vmatpush2.msra.mxu0 0.0
        %344 = vmatprep.subr.mxu0 0.0
        %345 = vmatpush2.msra.mxu0 0.0
        %346 = vmatprep.subr.mxu0 0.0
        %347 = vmatpush2.msra.mxu0 0.0
        %348 = vmatprep.subr.mxu0 0.0
        %349 = vmatpush2.msra.mxu0 0.0
        %350 = vmatprep.subr.mxu0 0.0
        %351 = vmatpush2.msra.mxu0 0.0
        %352 = vmatprep.subr.mxu0 0.0
        %353 = vmatpush2.msra.mxu0 0.0
        %354 = vmatprep.subr.mxu0 0.0
        %355 = vmatpush2.msra.mxu0 0.0
        %356 = vmatprep.subr.mxu0 0.0
        %357 = vmatpush2.msra.mxu0 0.0
        %358 = vmatprep.subr.mxu0 0.0
        %359 = vmatpush2.msra.mxu0 0.0
        %360 = vmatprep.subr.mxu0 0.0
        %361 = vmatpush2.msra.mxu0 0.0
        %362 = vmatprep.subr.mxu0 0.0
        %363 = vmatpush2.msra.mxu0 0.0
        %364 = vmatprep.subr.mxu0 0.0
        %365 = vmatpush2.msra.mxu0 0.0
        %366 = vmatprep.subr.mxu0 0.0
        %367 = vmatpush2.msra.mxu0 0.0
        %368 = vmatprep.subr.mxu0 0.0
        %369 = vmatpush2.msra.mxu0 0.0
        %370 = vmatprep.subr.mxu0 0.0
        %371 = vmatpush2.msra.mxu0 0.0
        %372 = vmatprep.subr.mxu0 0.0
        %373 = vmatpush2.msra.mxu0 0.0
        %374 = vmatprep.mubr.f32.mxu0 0.0
        %375 = vmatmul.mubr.f32.gmra.mxu0 %v277
        %v376 = vpop.f32.mrf.mxu0
        %v377 = vadd.f32 0.0, %v376
        %v378 = vpop.f32.mrf.mxu0
        %v379 = vadd.f32 0.0, %v378
        %380 = vdwg.mxu0
        %v381 = vld [vmem:[%s239] sm:$0xff]
        %v382 = vld [vmem:[#allocation8] sm:$0x1]
        %v383 = vlaneseq
        %v384 = vshrl.u32 %v383, 7
        %v385 = vsub.s32 0, %v384
        %v386 = vrot.slane %v382, %v385
        %v387 = vadd.f32 %v377, %v386
        %v388 = vld [vmem:[#allocation8 + $0x1] sm:$0x1]
        %v389 = vlaneseq
        %v390 = vshrl.u32 %v389, 7
        %v391 = vsub.s32 0, %v390
        %v392 = vrot.slane %v388, %v391
        %v393 = vadd.f32 %v379, %v392
        %v394 = vxor.u32 %v387, 2147483648
        %v395 = vmul.f32 %v394, 1.442695
        %v396 = vpow.pop %v395
        %v397 = vadd.f32 %v396, 1.0
        %v398 = vrcp.pop %v397
        %v399 = vmul.f32 1.0, %v398
        %v400 = vmul.f32 %v399, %v393
        %v401 = vadd.f32 %v400, %v381
        %402 = vadd.xlane.f32.xlu0 %v401
        %v403 = vpop.xlane.xlu0 %402
        %v404 = vmul.f32 %v403, 0.03125
        %v405 = vsub.f32 %v401, %v404
        %v406 = vld [vmem:[#allocation8 + $0x4] sm:$0x1]
        %v407 = vlaneseq
        %v408 = vshrl.u32 %v407, 7
        %v409 = vsub.s32 0, %v408
        %v410 = vrot.slane %v406, %v409
        %v411 = vmul.f32 %v405, %v410
        %v412 = vmul.f32 %v411, %v411
        %413 = vadd.xlane.f32.xlu0 %v412
        %v414 = vpop.xlane.xlu0 %413
        %v415 = vmul.f32 %v414, 0.03125
        %v416 = vadd.f32 %v415, 1e-05
        %v417 = vrsqrt.pop %v416
        %v418 = vmul.f32 %v405, %v417
        %v419 = vld [vmem:[#allocation8 + $0x2] sm:$0x1]
        %v420 = vlaneseq
        %v421 = vshrl.u32 %v420, 7
        %v422 = vsub.s32 0, %v421
        %v423 = vrot.slane %v419, %v422
        %v424 = vmul.f32 %v418, %v423
        %v425 = vld [vmem:[#allocation8 + $0x3] sm:$0x1]
        %v426 = vlaneseq
        %v427 = vshrl.u32 %v426, 7
        %v428 = vsub.s32 0, %v427
        %v429 = vrot.slane %v425, %v428
        %v430 = vadd.f32 %v424, %v429
        %431 = vst [vmem:[%s276] sm:$0xff] %v430
        %s432 = sand.u32 %s127, 1
        %s433 = scalar_lea.sflag [#allocation4], %s432
        %s434 = sand.u32 %s127, 1
        %s435 = smul.addr %s434, 8
        %s436 = scalar_lea.vmem [#allocation10], %s435
        // Predicated region
        $region53: #{tpu_custom_call.1} parent=35 // pred_check
          %p437 = pneg %p137
        $region54: #{tpu_custom_call.1} parent=35 // pred_check_branch
          %439 = sbr.rel (%p437) target = $region56
        $region55: #{tpu_custom_call.1} parent=35 // pred_region
          %s441 = ssub.s32 128, 128
          %442 = vsyncadd %s433, %s441
          %s443 = smul.addr %s25, 128
          %s444 = scalar_lea.hbm %s4, %s443
          %s446 = sshll.u32 %s436, 4
          %s447 = int_to_ptr.vmem [resolvable:$true] %s446
          %449 = dma.vmem_to_hbm [thread:$0]  %s447, 128, %s444, %s433
        $region56: #{tpu_custom_call.1} parent=35 // pred_fallthru
          _
      $region36: #{tpu_custom_call.1} parent=5 // pred_fallthru
        _
      %p450 = scmp.le.s32.totalorder 2, %s20
      // Predicated region
      $region57: #{tpu_custom_call.1} parent=5 // pred_check
        %p451 = pneg %p450
      $region58: #{tpu_custom_call.1} parent=5 // pred_check_branch
        %453 = sbr.rel (%p451) target = $region60
      $region59: #{tpu_custom_call.1} parent=5 // pred_region
        %s454 = ssub.s32 %s20, 2
        // Predicated region
        $region61: #{tpu_custom_call.1} parent=59 // pred_check
          %p455 = pneg %p143
        $region62: #{tpu_custom_call.1} parent=59 // pred_check_branch
          %457 = sbr.rel (%p455) target = $region64
        $region63: #{tpu_custom_call.1} parent=59 // pred_region
          %s458 = sand.u32 %s128, 1
          %s459 = scalar_lea.sflag [#allocation4], %s458
          %s460 = sand.u32 %s128, 1
          %s461 = smul.addr %s460, 8
          %s462 = scalar_lea.vmem [#allocation10], %s461
          %463 = dma.done %s459, 128
        $region64: #{tpu_custom_call.1} parent=59 // pred_fallthru
          _
      $region60: #{tpu_custom_call.1} parent=5 // pred_fallthru
        _
    $region6: #{tpu_custom_call.1} parent=1 // loop_footer
      %s24 = sadd.s32 1, %s20
    $region7: #{tpu_custom_call.1} parent=1 // loop_footer_branch
      %19 = sbr.rel target = $region3
    $region8: #{tpu_custom_call.1} parent=1 // loop_exit
      _
    %464 = vsyncpa [#allocation3], 1
    %s465 = scalar_lea.sflag [#allocation3], 1
    %466 = vsyncpa %s465, 1
    %467 = vsyncpa [#allocation6], 1
    %s468 = scalar_lea.sflag [#allocation6], 1
    %469 = vsyncpa %s468, 1
    %470 = vsyncpa [#allocation9], 1
    %471 = vsyncpa [#allocation4], 1
    %s472 = scalar_lea.sflag [#allocation4], 1
    %473 = vsyncpa %s472, 1

</llo_original>
